<compile_context>
chip_gen: v7x
topology: tpu7x:2x2x1
jax: 0.10.0
libtpu: 0.0.40
codegen_flags: <defaults>
</compile_context>

<pallas_src>
import jax
import jax.numpy as jnp
from jax.experimental import pallas as pl
from jax.experimental.pallas import tpu as pltpu

LN_EPS = 1e-5


def _sublayer_connection_kernel(x_ref, w_ref, b_ref, o_ref, xn_ref):
    # x_ref:  (tm, size)  row tile, full hidden on lanes (LN reduces lanes)
    # w_ref:  (size, tn)  gamma-folded weight tile (bf16 MXU operand)
    # b_ref:  (1, tn)     beta-folded bias tile (f32)
    # o_ref:  (tm, tn)    output tile
    # xn_ref: (tm, size)  persistent bf16 scratch holding the normalized rows
    size = x_ref.shape[-1]
    tn = o_ref.shape[-1]
    j = pl.program_id(1)

    # --- LayerNorm once per row tile (j == 0), reused for every column tile --
    @pl.when(j == 0)
    def _():
        x = x_ref[...].astype(jnp.float32)
        inv_n = jnp.float32(1.0 / size)
        mean = jnp.sum(x, axis=-1, keepdims=True) * inv_n          # one-pass stats
        ex2 = jnp.sum(x * x, axis=-1, keepdims=True) * inv_n
        var = jnp.maximum(ex2 - mean * mean, 0.0)
        xn_ref[...] = ((x - mean) * jax.lax.rsqrt(var + LN_EPS)).astype(jnp.bfloat16)

    # --- sublayer: Linear on the MXU (gamma folded into W, beta into bias) ---
    h = jnp.dot(xn_ref[...], w_ref[...], preferred_element_type=jnp.float32)
    h = h + b_ref[...]

    # --- dropout (inference-mode identity) + residual -------------------------
    if tn == size:
        x_res = x_ref[...].astype(jnp.float32)
    else:
        col0 = pl.multiple_of(j * tn, 128)
        x_res = x_ref[:, pl.ds(col0, tn)].astype(jnp.float32)

    o_ref[...] = (x_res + h).astype(o_ref.dtype)


def _round_up(v, m):
    return (v + m - 1) // m * m


def _vmem_capacity_bytes():
    try:
        return int(pltpu.get_tpu_info().vmem_capacity_bytes)
    except Exception:
        return 64 << 20          # conservative fallback: assume v7x-sized VMEM


def _choose_tn(size, w_budget_bytes):
    """Output-column tile: full W if it fits the residency budget, otherwise the
    largest divisor of `size` that is a multiple of 128 and keeps the
    double-buffered bf16 W tile within budget."""
    if size % 128 != 0:
        return size                                   # non-lane-dense hidden: no N tiling
    if size * size * 2 <= w_budget_bytes:
        return size                                   # W fully resident (single-buffered)
    best = 128
    for cand in range(128, size, 128):
        if size % cand == 0 and 2 * size * cand * 2 <= w_budget_bytes:
            best = cand
    return best


def sublayer_connection(x, gamma, beta, w, b, *, tm=None, tn=None,
                        vmem_limit_bytes=None):
    """out = x + Linear(LayerNorm(x)); dropout is inference-mode identity.

    x: (rows, size). `w` is (size, size) in (in, out) layout; gamma/beta are the
    LayerNorm affine params; b is the Linear bias.
    """
    rows, size = x.shape

    vmem_cap = _vmem_capacity_bytes()
    small_vmem = vmem_cap <= (64 << 20)               # v7x: 64 MiB per TensorCore

    if vmem_limit_bytes is None:
        vmem_limit_bytes = (48 << 20) if small_vmem else (96 << 20)
    w_budget = (16 << 20) if small_vmem else (40 << 20)

    if tn is None:
        tn = _choose_tn(size, w_budget)
    assert size % tn == 0, "tn must divide the hidden size"

    if tm is None:
        tm = 128 if (small_vmem and size >= 4096) else 256
    tm = _round_up(min(tm, _round_up(rows, 8)), 8)

    grid_i = pl.cdiv(rows, tm)                        # ragged last tile: masked writes
    grid_j = size // tn
    grid = (grid_i, grid_j)

    # Fold the LayerNorm affine into the projection:
    #   (gamma*xn + beta) @ W + b  ==  xn @ (gamma[:,None]*W) + (beta @ W + b)
    gamma_f = gamma.astype(jnp.float32)
    beta_f = beta.astype(jnp.float32)
    w_f = w.astype(jnp.float32)
    w_eff = (gamma_f[:, None] * w_f).astype(jnp.bfloat16)      # bf16 MXU operand
    b_eff = (beta_f @ w_f + b.astype(jnp.float32)).reshape(1, size)

    invariant = (grid_j == 1)                         # W / bias never move on the grid
    wb_kwargs = dict(pipeline_mode=pl.Buffered(1)) if invariant else {}

    itemsize = jnp.dtype(x.dtype).itemsize
    w_bytes = size * size * 2 * (1 if invariant else grid_i)   # re-read per row tile if N-tiled

    return pl.pallas_call(
        _sublayer_connection_kernel,
        out_shape=jax.ShapeDtypeStruct((rows, size), x.dtype),
        grid_spec=pltpu.PrefetchScalarGridSpec(
            num_scalar_prefetch=0,
            grid=grid,
            in_specs=[
                pl.BlockSpec((tm, size), lambda i, j: (i, 0)),              # x rows
                pl.BlockSpec((size, tn), lambda i, j: (0, j), **wb_kwargs),  # W' (bf16)
                pl.BlockSpec((1, tn), lambda i, j: (0, j), **wb_kwargs),     # b' (f32)
            ],
            out_specs=pl.BlockSpec((tm, tn), lambda i, j: (i, j)),
            scratch_shapes=[pltpu.VMEM((tm, size), jnp.bfloat16)],           # persisted xn
        ),
        compiler_params=pltpu.CompilerParams(
            # Rows shard across TensorCores; j must stay sequential so the LN
            # scratch written at j==0 is valid for every later j step.
            dimension_semantics=("parallel", "arbitrary"),
            vmem_limit_bytes=vmem_limit_bytes),
        cost_estimate=pl.CostEstimate(
            flops=2 * rows * size * size + 10 * rows * size,
            transcendentals=rows,
            bytes_accessed=(2 * rows * size * itemsize          # x in, out
                            + w_bytes                           # W' reads
                            + size * 4)),                       # bias
    )(x, w_eff, b_eff)


def _reference(x, gamma, beta, w, b):
    """Mirrors the kernel numerics: f32 LN stats, gamma/beta folded, bf16 matmul
    operands with f32 accumulation."""
    xf = x.astype(jnp.float32)
    mean = jnp.mean(xf, axis=-1, keepdims=True)
    var = jnp.mean((xf - mean) ** 2, axis=-1, keepdims=True)
    xn = (xf - mean) * jax.lax.rsqrt(var + LN_EPS)
    gamma_f = gamma.astype(jnp.float32)
    beta_f = beta.astype(jnp.float32)
    w_f = w.astype(jnp.float32)
    w_eff = (gamma_f[:, None] * w_f).astype(jnp.bfloat16)
    b_eff = beta_f @ w_f + b.astype(jnp.float32)
    h = jnp.dot(xn.astype(jnp.bfloat16), w_eff,
                preferred_element_type=jnp.float32) + b_eff
    return (xf + h).astype(x.dtype)


if __name__ == "__main__":
    # Small, lane-dense demo hidden size (multiple of 128 -> full-lane stores).
    batch, seq, size = 2, 8, 128
    key = jax.random.PRNGKey(0)
    kx, kw, kg, kb = jax.random.split(key, 4)

    x = jax.random.normal(kx, (batch, seq, size), dtype=jnp.float32)

    # Deterministic, non-trivial synthetic parameters (not a checkpoint).
    gamma = 1.0 + 0.1 * jax.random.normal(kg, (size,), jnp.float32)   # LayerNorm weight
    beta = 0.1 * jax.random.normal(kb, (size,), jnp.float32)          # LayerNorm bias
    w = jax.random.normal(kw, (size, size), jnp.float32) * (1.0 / size ** 0.5)
    b = 0.01 * jnp.arange(size, dtype=jnp.float32)

    x2d = x.reshape(batch * seq, size)                 # (rows, size) layout
    out2d = sublayer_connection(x2d, gamma, beta, w, b)
    out = out2d.reshape(batch, seq, size)
    jax.block_until_ready(out)

    ref = _reference(x2d, gamma, beta, w, b).reshape(batch, seq, size)
    assert jnp.allclose(out, ref, atol=1e-2, rtol=1e-2), "mismatch vs reference"

    print("KERNEL_OK")
</pallas_src>

<mosaic_0001>
module attributes {stable_mosaic.version = 11 : i64} {
  func.func @_sublayer_connection_kernel(%arg0: i32, %arg1: i32, %arg2: memref<16x128xf32, #tpu.memory_space<vmem>>, %arg3: memref<128x128xbf16, #tpu.memory_space<vmem>>, %arg4: memref<1x128xf32, #tpu.memory_space<vmem>>, %arg5: memref<16x128xf32, #tpu.memory_space<vmem>>, %arg6: memref<16x128xbf16, #tpu.memory_space<vmem>>) attributes {dimension_semantics = [#tpu.dimension_semantics<parallel>, #tpu.dimension_semantics<arbitrary>], iteration_bounds = array<i64: 1, 1>, scalar_prefetch = 0 : i64, scratch_operands = 1 : i64, tpu.core_type = #tpu.core_type<tc>, window_params = [{transform_indices = @transform_0, window_bounds = array<i64: 16, 128>}, {pipeline_mode = #tpu.pipeline_mode<synchronous>, transform_indices = @transform_1, window_bounds = array<i64: 128, 128>}, {pipeline_mode = #tpu.pipeline_mode<synchronous>, transform_indices = @transform_2, window_bounds = array<i64: 1, 128>}, {transform_indices = @transform_3, window_bounds = array<i64: 16, 128>}]} {
    %c0_i32 = arith.constant 0 : i32
    %0 = arith.cmpi eq, %arg1, %c0_i32 : i32
    %1 = arith.extui %0 : i1 to i32
    %c0_i32_0 = arith.constant 0 : i32
    %2 = arith.cmpi ne, %1, %c0_i32_0 : i32
    scf.if %2 {
      %c0_10 = arith.constant 0 : index
      %c0_11 = arith.constant 0 : index
      %12 = vector.load %arg2[%c0_10, %c0_11] : memref<16x128xf32, #tpu.memory_space<vmem>>, vector<16x128xf32>
      %cst_12 = arith.constant dense<0.000000e+00> : vector<16xf32>
      %13 = vector.multi_reduction <add>, %12, %cst_12 [1] : vector<16x128xf32> to vector<16xf32>
      %14 = vector.shape_cast %13 : vector<16xf32> to vector<16x1xf32>
      %cst_13 = arith.constant 7.812500e-03 : f32
      %15 = vector.broadcast %cst_13 : f32 to vector<16x1xf32>
      %16 = arith.mulf %14, %15 : vector<16x1xf32>
      %17 = arith.mulf %12, %12 : vector<16x128xf32>
      %cst_14 = arith.constant dense<0.000000e+00> : vector<16xf32>
      %18 = vector.multi_reduction <add>, %17, %cst_14 [1] : vector<16x128xf32> to vector<16xf32>
      %19 = vector.shape_cast %18 : vector<16xf32> to vector<16x1xf32>
      %cst_15 = arith.constant 7.812500e-03 : f32
      %20 = vector.broadcast %cst_15 : f32 to vector<16x1xf32>
      %21 = arith.mulf %19, %20 : vector<16x1xf32>
      %22 = arith.mulf %16, %16 : vector<16x1xf32>
      %23 = arith.subf %21, %22 : vector<16x1xf32>
      %cst_16 = arith.constant 0.000000e+00 : f32
      %24 = vector.broadcast %cst_16 : f32 to vector<16x1xf32>
      %25 = arith.maximumf %23, %24 : vector<16x1xf32>
      %26 = vector.broadcast %16 : vector<16x1xf32> to vector<16x128xf32>
      %27 = arith.subf %12, %26 : vector<16x128xf32>
      %cst_17 = arith.constant 9.99999974E-6 : f32
      %28 = vector.broadcast %cst_17 : f32 to vector<16x1xf32>
      %29 = arith.addf %25, %28 : vector<16x1xf32>
      %30 = math.rsqrt %29 : vector<16x1xf32>
      %31 = vector.broadcast %30 : vector<16x1xf32> to vector<16x128xf32>
      %32 = arith.mulf %27, %31 : vector<16x128xf32>
      %33 = arith.truncf %32 : vector<16x128xf32> to vector<16x128xbf16>
      %c0_18 = arith.constant 0 : index
      %c0_19 = arith.constant 0 : index
      %34 = vector.load %arg6[%c0_18, %c0_19] : memref<16x128xbf16, #tpu.memory_space<vmem>>, vector<16x128xbf16>
      tpu.vector_store %arg6[%c0_18, %c0_19], %33 {strides = array<i32>} : memref<16x128xbf16, #tpu.memory_space<vmem>>, vector<16x128xbf16>,
    } else {
    }
    %c0 = arith.constant 0 : index
    %c0_1 = arith.constant 0 : index
    %3 = vector.load %arg6[%c0, %c0_1] : memref<16x128xbf16, #tpu.memory_space<vmem>>, vector<16x128xbf16>
    %c0_2 = arith.constant 0 : index
    %c0_3 = arith.constant 0 : index
    %4 = vector.load %arg3[%c0_2, %c0_3] : memref<128x128xbf16, #tpu.memory_space<vmem>>, vector<128x128xbf16>
    %cst = arith.constant dense<0.000000e+00> : vector<16x128xf32>
    %5 = tpu.matmul %3, %4, %cst {dimension_numbers = #tpu.dot_dimension_numbers<[1], [0], [0], [1], [0, 0, 1, 1], [], []>} : vector<16x128xbf16>, vector<128x128xbf16>, vector<16x128xf32> -> vector<16x128xf32>
    %c0_4 = arith.constant 0 : index
    %c0_5 = arith.constant 0 : index
    %6 = vector.load %arg4[%c0_4, %c0_5] : memref<1x128xf32, #tpu.memory_space<vmem>>, vector<1x128xf32>
    %7 = vector.broadcast %6 : vector<1x128xf32> to vector<16x128xf32>
    %8 = arith.addf %5, %7 : vector<16x128xf32>
    %c0_6 = arith.constant 0 : index
    %c0_7 = arith.constant 0 : index
    %9 = vector.load %arg2[%c0_6, %c0_7] : memref<16x128xf32, #tpu.memory_space<vmem>>, vector<16x128xf32>
    %10 = arith.addf %9, %8 : vector<16x128xf32>
    %c0_8 = arith.constant 0 : index
    %c0_9 = arith.constant 0 : index
    %11 = vector.load %arg5[%c0_8, %c0_9] : memref<16x128xf32, #tpu.memory_space<vmem>>, vector<16x128xf32>
    tpu.vector_store %arg5[%c0_8, %c0_9], %10 {strides = array<i32>} : memref<16x128xf32, #tpu.memory_space<vmem>>, vector<16x128xf32>,
    return
  }
  func.func @transform_0(%arg0: i32, %arg1: i32) -> (i32, i32) {
    %c0_i32 = arith.constant 0 : i32
    %c0_i32_0 = arith.constant 0 : i32
    return %arg0, %c0_i32 : i32, i32
  }
  func.func @transform_1(%arg0: i32, %arg1: i32) -> (i32, i32) {
    %c0_i32 = arith.constant 0 : i32
    %c0_i32_0 = arith.constant 0 : i32
    return %c0_i32, %arg1 : i32, i32
  }
  func.func @transform_2(%arg0: i32, %arg1: i32) -> (i32, i32) {
    %c0_i32 = arith.constant 0 : i32
    %c0_i32_0 = arith.constant 0 : i32
    return %c0_i32, %arg1 : i32, i32
  }
  func.func @transform_3(%arg0: i32, %arg1: i32) -> (i32, i32) {
    %c0_i32 = arith.constant 0 : i32
    return %arg0, %arg1 : i32, i32
  }
}

</mosaic_0001>

<llo_original>
// kernel: tpu_custom_call.1
$region0: #{tpu_custom_call.1}
  #allocation0 [shape = 'u32[]', space=smem, size = 0x4, offset = 0x4, fixed_abs, tag = 'smem constant byte address 0x4 - core index']
  #allocation1 [shape = 'u32[144,128]{1,0:T(1,128)}', space=vmem, size = 0x12000, scoped, tag = 'internal scratch']
  #allocation2 [shape = 'bf16[16,128]{1,0:T(16,128)(2,1)}', space=vmem, size = 0x1000, scoped, tag = 'scratch operand']
  %s0 = inlined_call_operand.hbm [shape: f32[16,128], index: 0, kind: input, shape index: {}]
  %s1 = inlined_call_operand.hbm [shape: bf16[128,128], index: 1, kind: input, shape index: {}]
  %s2 = inlined_call_operand.vmem [shape: f32[1,128], index: 2, kind: input, shape index: {}]
  %s3 = inlined_call_operand.hbm [shape: f32[16,128], index: 3, kind: output, shape index: {}]
  %s4 = sld [smem:[#allocation0]]
  $region34: #{tpu_custom_call.1} parent=0
    _
  %s6 = ssub.s32 1, %s4
  %s7 = scalar_select 0, %s6, %s4
  $region1: #{tpu_custom_call.1} parent=0
    #allocation3 [shape = 'u8[8192]{0}', space=vmem, size = 0x2000, scoped, tag = 'input window, operand 0, single buffered']
    #allocation4 [shape = 's32[1]{0}', space=sflag, size = 0x4, scoped, tag = 'scoped memory for tpu_custom_call.1']
    #allocation5 [shape = 's32[1]{0}', space=sflag, size = 0x4, scoped, tag = 'scoped memory for tpu_custom_call.1']
    #allocation6 [shape = 'u8[32768]{0}', space=vmem, size = 0x8000, scoped, tag = 'input window, operand 1, single buffered']
    #allocation7 [shape = 's32[1]{0}', space=sflag, size = 0x4, scoped, tag = 'scoped memory for tpu_custom_call.1']
    #allocation8 [shape = 'u8[8192]{0}', space=vmem, size = 0x2000, scoped, tag = 'output window, operand 0, single buffered']
    %8 = vsyncpa [#allocation4], 0
    %9 = vsyncpa [#allocation7], 0
    %10 = vsyncpa [#allocation5], 0
    // Predicated region
    $region2: #{tpu_custom_call.1} parent=1 // pred_check
      _
    $region3: #{tpu_custom_call.1} parent=1 // pred_check_branch
      %12 = sbr.rel (0) target = $region5
    $region4: #{tpu_custom_call.1} parent=1 // pred_region
      %s14 = ssub.s32 256, 256
      %15 = vsyncadd [#allocation4], %s14
      %s16 = sshll.u32 [#allocation3], 4
      %s17 = int_to_ptr.vmem [resolvable:$true] %s16
      %22 = dma.hbm_to_vmem [thread:$0]  %s0, 256, %s17, [#allocation4], 128, 128, 8
    $region5: #{tpu_custom_call.1} parent=1 // pred_fallthru
      _
    // Predicated region
    $region6: #{tpu_custom_call.1} parent=1 // pred_check
      _
    $region7: #{tpu_custom_call.1} parent=1 // pred_check_branch
      %24 = sbr.rel (0) target = $region9
    $region8: #{tpu_custom_call.1} parent=1 // pred_region
      %s26 = ssub.s32 1024, 1024
      %27 = vsyncadd [#allocation7], %s26
      %s28 = sshll.u32 [#allocation6], 4
      %s29 = int_to_ptr.vmem [resolvable:$true] %s28
      %34 = dma.hbm_to_vmem [thread:$0]  %s1, 1024, %s29, [#allocation7], 64, 64, 4
    $region9: #{tpu_custom_call.1} parent=1 // pred_fallthru
      _
    // Predicated region
    $region10: #{tpu_custom_call.1} parent=1 // pred_check
      _
    $region11: #{tpu_custom_call.1} parent=1 // pred_check_branch
      %36 = sbr.rel (0) target = $region13
    $region12: #{tpu_custom_call.1} parent=1 // pred_region
      _
    $region13: #{tpu_custom_call.1} parent=1 // pred_fallthru
      _
    // Predicated region
    $region14: #{tpu_custom_call.1} parent=1 // pred_check
      _
    $region15: #{tpu_custom_call.1} parent=1 // pred_check_branch
      %38 = sbr.rel (0) target = $region17
    $region16: #{tpu_custom_call.1} parent=1 // pred_region
      %39 = dma.done [#allocation4], 256
    $region17: #{tpu_custom_call.1} parent=1 // pred_fallthru
      _
    // Predicated region
    $region18: #{tpu_custom_call.1} parent=1 // pred_check
      _
    $region19: #{tpu_custom_call.1} parent=1 // pred_check_branch
      %41 = sbr.rel (0) target = $region21
    $region20: #{tpu_custom_call.1} parent=1 // pred_region
      %42 = dma.done [#allocation7], 1024
    $region21: #{tpu_custom_call.1} parent=1 // pred_fallthru
      _
    %p44 = scmp.eq.s32.totalorder 0, 0
    // Predicated region
    $region22: #{tpu_custom_call.1} parent=1 // pred_check
      %p45 = pneg %p44
    $region23: #{tpu_custom_call.1} parent=1 // pred_check_branch
      %47 = sbr.rel (%p45) target = $region25
    $region24: #{tpu_custom_call.1} parent=1 // pred_region
      %v48 = vld [vmem:[#allocation3] sm:$0xff]
      %v49 = vld [vmem:[#allocation3 + $0x8] sm:$0xff]
      %50 = vadd.xlane.f32.xlu0 %v48
      %v51 = vpop.xlane.xlu0 %50
      %52 = vadd.xlane.f32.xlu0 %v49
      %v53 = vpop.xlane.xlu0 %52
      %v54 = vmul.f32 %v51, 0.0078125
      %v55 = vmul.f32 %v53, 0.0078125
      %v56 = vmul.f32 %v48, %v48
      %v57 = vmul.f32 %v49, %v49
      %58 = vadd.xlane.f32.xlu0 %v56
      %v59 = vpop.xlane.xlu0 %58
      %60 = vadd.xlane.f32.xlu0 %v57
      %v61 = vpop.xlane.xlu0 %60
      %v62 = vmul.f32 %v59, 0.0078125
      %v63 = vmul.f32 %v61, 0.0078125
      %v64 = vmul.f32 %v54, %v54
      %v65 = vmul.f32 %v55, %v55
      %v66 = vsub.f32 %v62, %v64
      %v67 = vsub.f32 %v63, %v65
      %v68 = vmax.f32 %v66, 0.0
      %v69 = vmax.f32 %v67, 0.0
      %v70 = vsub.f32 %v48, %v54
      %v71 = vsub.f32 %v49, %v55
      %v72 = vadd.f32 %v68, 1e-05
      %v73 = vadd.f32 %v69, 1e-05
      %v74 = vrsqrt.pop %v72
      %v75 = vrsqrt.pop %v73
      %v76 = vmul.f32 %v70, %v74
      %v77 = vmul.f32 %v71, %v75
      %v78 = vpack.c.bf16 %v77, %v76
      %79 = vst [vmem:[#allocation2] sm:$0xff] %v78
    $region25: #{tpu_custom_call.1} parent=1 // pred_fallthru
      _
    %v80 = vld [vmem:[#allocation2] sm:$0xff]
    %v81 = vld [vmem:[#allocation6] sm:$0xf]
    %v82 = vld [vmem:[#allocation6 + $0x4] sm:$0xf]
    %v83 = vld [vmem:[#allocation6 + $0x8] sm:$0xf]
    %v84 = vld [vmem:[#allocation6 + $0xc] sm:$0xf]
    %v85 = vld [vmem:[#allocation6 + $0x10] sm:$0xf]
    %v86 = vld [vmem:[#allocation6 + $0x14] sm:$0xf]
    %v87 = vld [vmem:[#allocation6 + $0x18] sm:$0xf]
    %v88 = vld [vmem:[#allocation6 + $0x1c] sm:$0xf]
    %v89 = vld [vmem:[#allocation6 + $0x20] sm:$0xf]
    %v90 = vld [vmem:[#allocation6 + $0x24] sm:$0xf]
    %v91 = vld [vmem:[#allocation6 + $0x28] sm:$0xf]
    %v92 = vld [vmem:[#allocation6 + $0x2c] sm:$0xf]
    %v93 = vld [vmem:[#allocation6 + $0x30] sm:$0xf]
    %v94 = vld [vmem:[#allocation6 + $0x34] sm:$0xf]
    %v95 = vld [vmem:[#allocation6 + $0x38] sm:$0xf]
    %v96 = vld [vmem:[#allocation6 + $0x3c] sm:$0xf]
    %v97 = vld [vmem:[%s2] sm:$0x1]
    %v99 = vlaneseq
    %v100 = vshrl.u32 %v99, 7
    %v101 = vsub.s32 0, %v100
    %v102 = vrot.slane %v97, %v101
    %v120 = vunpack.c.l.b16 %v81
    %v121 = vunpack.c.l.b16 %v82
    %v122 = vunpack.c.l.b16 %v83
    %v123 = vunpack.c.l.b16 %v84
    %v124 = vunpack.c.l.b16 %v85
    %v125 = vunpack.c.l.b16 %v86
    %v126 = vunpack.c.l.b16 %v87
    %v127 = vunpack.c.l.b16 %v88
    %v128 = vunpack.c.l.b16 %v89
    %v129 = vunpack.c.l.b16 %v90
    %v130 = vunpack.c.l.b16 %v91
    %v131 = vunpack.c.l.b16 %v92
    %v132 = vunpack.c.l.b16 %v93
    %v133 = vunpack.c.l.b16 %v94
    %v134 = vunpack.c.l.b16 %v95
    %v135 = vunpack.c.l.b16 %v96
    %v136 = vpack.c.b16 %v121, %v120
    %v137 = vpack.c.b16 %v123, %v122
    %v138 = vpack.c.b16 %v125, %v124
    %v139 = vpack.c.b16 %v127, %v126
    %v140 = vpack.c.b16 %v129, %v128
    %v141 = vpack.c.b16 %v131, %v130
    %v142 = vpack.c.b16 %v133, %v132
    %v143 = vpack.c.b16 %v135, %v134
    %152 = vmatprep.subr.bf16.mxu0 0
    %153 = vmatpush1.bf16.msra.mxu0 %v136
    %154 = vmatprep.subr.bf16.mxu0 0
    %155 = vmatpush1.bf16.msra.mxu0 %v137
    %156 = vmatprep.subr.bf16.mxu0 0
    %157 = vmatpush1.bf16.msra.mxu0 %v138
    %158 = vmatprep.subr.bf16.mxu0 0
    %159 = vmatpush1.bf16.msra.mxu0 %v139
    %160 = vmatprep.subr.bf16.mxu0 0
    %161 = vmatpush1.bf16.msra.mxu0 %v140
    %162 = vmatprep.subr.bf16.mxu0 0
    %163 = vmatpush1.bf16.msra.mxu0 %v141
    %164 = vmatprep.subr.bf16.mxu0 0
    %165 = vmatpush1.bf16.msra.mxu0 %v142
    %166 = vmatprep.subr.bf16.mxu0 0
    %167 = vmatpush1.bf16.msra.mxu0 %v143
    %168 = vmatprep.subr.bf16.mxu0 0
    %169 = vmatpush1.bf16.msra.mxu0 0
    %170 = vmatprep.subr.bf16.mxu0 0
    %171 = vmatpush1.bf16.msra.mxu0 0
    %172 = vmatprep.subr.bf16.mxu0 0
    %173 = vmatpush1.bf16.msra.mxu0 0
    %174 = vmatprep.subr.bf16.mxu0 0
    %175 = vmatpush1.bf16.msra.mxu0 0
    %176 = vmatprep.subr.bf16.mxu0 0
    %177 = vmatpush1.bf16.msra.mxu0 0
    %178 = vmatprep.subr.bf16.mxu0 0
    %179 = vmatpush1.bf16.msra.mxu0 0
    %180 = vmatprep.subr.bf16.mxu0 0
    %181 = vmatpush1.bf16.msra.mxu0 0
    %182 = vmatprep.subr.bf16.mxu0 0
    %183 = vmatpush1.bf16.msra.mxu0 0
    %184 = vmatprep.mubr.bf16.mxu0 0
    %185 = vmatmul.mubr.bf16.gmra.mrb[0].mxu0 %v80
    %v186 = vpop.f32.mrb[0].mxu0
    %v187 = vadd.f32 %v102, %v186
    %v188 = vpop.f32.mrb[0].mxu0
    %v189 = vpop.f32.mrb[0].mxu0
    %v190 = vadd.f32 %v102, %v189
    %v191 = vpop.f32.mrb[0].mxu0
    %192 = vdwg.mxu0
    %v193 = vld [vmem:[#allocation3] sm:$0xff]
    %v194 = vld [vmem:[#allocation3 + $0x8] sm:$0xff]
    %v195 = vadd.f32 %v193, %v187
    %v196 = vadd.f32 %v194, %v190
    %197 = vst [vmem:[#allocation8] sm:$0xff] %v195
    %198 = vst [vmem:[#allocation8 + $0x8] sm:$0xff] %v196
    // Predicated region
    $region26: #{tpu_custom_call.1} parent=1 // pred_check
      _
    $region27: #{tpu_custom_call.1} parent=1 // pred_check_branch
      %200 = sbr.rel (0) target = $region29
    $region28: #{tpu_custom_call.1} parent=1 // pred_region
      %s202 = ssub.s32 256, 256
      %203 = vsyncadd [#allocation5], %s202
      %s204 = sshll.u32 [#allocation8], 4
      %s205 = int_to_ptr.vmem [resolvable:$true] %s204
      %210 = dma.vmem_to_hbm [thread:$0]  %s205, 256, %s3, [#allocation5], 128, 128, 8
    $region29: #{tpu_custom_call.1} parent=1 // pred_fallthru
      _
    // Predicated region
    $region30: #{tpu_custom_call.1} parent=1 // pred_check
      _
    $region31: #{tpu_custom_call.1} parent=1 // pred_check_branch
      %212 = sbr.rel (0) target = $region33
    $region32: #{tpu_custom_call.1} parent=1 // pred_region
      %213 = dma.done [#allocation5], 256
    $region33: #{tpu_custom_call.1} parent=1 // pred_fallthru
      _
    %214 = vsyncpa [#allocation4], 1
    %215 = vsyncpa [#allocation7], 1
    %216 = vsyncpa [#allocation5], 1

</llo_original>
